<compile_context>
chip_gen: v5e
topology: v5e:2x2
jax: 0.10.0
libtpu: 0.0.40
codegen_flags: <defaults>
</compile_context>

<pallas_src>
import functools

import jax
import jax.numpy as jnp
from jax.experimental import pallas as pl
from jax.experimental.pallas import tpu as pltpu

_BN_EPS = 1e-5
_C_PAD = 128  # fixed lane-dense channel width (one full vreg lane)


def _fused_gcn_kernel(a_ref, h0_ref, w_ref, bnp_ref, o_ref, *, n_layers):
    """Fused multi-layer GCN: ReLU(BatchNorm(A_norm @ H @ W)) per layer.

    a_ref   : (N, N)              bf16  normalized adjacency
    h0_ref  : (N, C_PAD)          bf16  zero-padded input node features
    w_ref   : (L, C_PAD, C_PAD)   bf16  zero-padded stacked GraphConv weights
    bnp_ref : (L, 2, C_PAD)       f32   stacked [gamma; beta] per layer (0-padded)
    o_ref   : (N, C_PAD)          f32   lane-dense padded output
    """
    a = a_ref[...]                                  # (N, N) bf16, loaded once
    h = h0_ref[...]                                 # (N, C_PAD) bf16

    for l in range(n_layers):                       # static unroll over layers
        w = w_ref[l]                                # (C_PAD, C_PAD) bf16
        hb = h.astype(jnp.bfloat16)                 # no-op for layer 0

        # GraphConv (norm='both'): aggregate then project, fp32 accumulation.
        ah = jnp.dot(a, hb, preferred_element_type=jnp.float32)       # (N, C_PAD)
        y = jnp.dot(ah.astype(jnp.bfloat16), w,
                    preferred_element_type=jnp.float32)               # (N, C_PAD)
        # NOTE: GraphConv bias omitted — zero-initialized in DGL and exactly
        # cancelled by the training-mode BatchNorm mean subtraction below.

        # BatchNorm1d over nodes (training-mode, biased variance), centered
        # two-reduction variance on the VMEM-resident y; fp32 VPU + EUP rsqrt.
        gamma = bnp_ref[l, 0:1, :]                  # (1, C_PAD)
        beta = bnp_ref[l, 1:2, :]                   # (1, C_PAD)
        mean = jnp.mean(y, axis=0, keepdims=True)
        centered = y - mean
        var = jnp.mean(centered * centered, axis=0, keepdims=True)
        inv_std = jax.lax.rsqrt(var + _BN_EPS)
        h = jnp.maximum(centered * inv_std * gamma + beta, 0.0)       # BN + ReLU

    o_ref[...] = h                                  # full-lane unmasked store


def gcn_forward(a_norm_bf16, h0_padded_bf16, w_stack, bn_stack, layer_dims):
    """Run the full fused GCN forward pass in a single pallas_call.

    Inputs must already be in their kernel dtypes/padded layouts (see the
    pack_* helpers) so no per-call wrapper casts re-read HBM.
    """
    n = h0_padded_bf16.shape[0]
    n_layers = len(layer_dims)
    c_out_last = layer_dims[-1][1]

    a_bytes = a_norm_bf16.size * 2
    h0_bytes = h0_padded_bf16.size * 2
    w_bytes = w_stack.size * 2
    bn_bytes = bn_stack.size * 4
    out_bytes = n * _C_PAD * 4
    # flops: per layer one (N,N)x(N,C_PAD) and one (N,C_PAD)x(C_PAD,C_PAD) matmul.
    flops = n_layers * (2 * n * n * _C_PAD + 2 * n * _C_PAD * _C_PAD)
    transcendentals = n_layers * _C_PAD             # rsqrt per channel per layer

    # Everything is whole-array VMEM resident at these sizes; double-buffer
    # factor + activation scratch headroom, capped below v7x's 64 MiB physical.
    vmem_need = 2 * (a_bytes + h0_bytes + w_bytes + bn_bytes + out_bytes) \
        + 4 * n * _C_PAD * 4
    vmem_limit = int(min(48 * 1024 * 1024, max(vmem_need, 8 * 1024 * 1024)))

    vmem = pl.BlockSpec(memory_space=pltpu.MemorySpace.VMEM)
    kernel = functools.partial(_fused_gcn_kernel, n_layers=n_layers)
    out_padded = pl.pallas_call(
        kernel,
        out_shape=jax.ShapeDtypeStruct((n, _C_PAD), jnp.float32),
        in_specs=[vmem, vmem, vmem, vmem],
        out_specs=vmem,
        compiler_params=pltpu.CompilerParams(vmem_limit_bytes=vmem_limit),
        cost_estimate=pl.CostEstimate(
            flops=flops,
            transcendentals=transcendentals,
            bytes_accessed=a_bytes + h0_bytes + w_bytes + bn_bytes + out_bytes,
        ),
    )(a_norm_bf16, h0_padded_bf16, w_stack, bn_stack)
    # Lane-dense kernel output; trim the real channel count outside the kernel.
    return out_padded[:, :c_out_last]


def init_params(key, in_features, hidden_sizes, out_features):
    """Per-layer (W, gamma, beta), matching the module's layer structure."""
    dims = [in_features] + list(hidden_sizes) + [out_features]
    params = []
    for i in range(len(dims) - 1):
        c_in, c_out = dims[i], dims[i + 1]
        key, wk = jax.random.split(key)
        # Xavier-uniform GraphConv weight (DGL default reset); bias is zero and
        # cancelled by training-mode BN, so it is not materialized at all.
        limit = (6.0 / (c_in + c_out)) ** 0.5
        w = jax.random.uniform(wk, (c_in, c_out), jnp.float32, -limit, limit)
        gamma = jnp.ones((c_out,), jnp.float32)     # BatchNorm1d weight
        beta = jnp.zeros((c_out,), jnp.float32)     # BatchNorm1d bias
        params.append((w, gamma, beta))
    layer_dims = [(dims[i], dims[i + 1]) for i in range(len(dims) - 1)]
    return params, layer_dims


def pack_params(params, layer_dims):
    """Stack per-layer params into fixed-width (C_PAD) dense arrays (one-time)."""
    n_layers = len(params)
    w_stack = jnp.zeros((n_layers, _C_PAD, _C_PAD), jnp.float32)
    bn_stack = jnp.zeros((n_layers, 2, _C_PAD), jnp.float32)
    for l, ((w, gamma, beta), (c_in, c_out)) in enumerate(zip(params, layer_dims)):
        w_stack = w_stack.at[l, :c_in, :c_out].set(w)
        bn_stack = bn_stack.at[l, 0, :c_out].set(gamma)
        bn_stack = bn_stack.at[l, 1, :c_out].set(beta)
        # Padded lanes keep gamma = beta = 0 -> stay exactly zero through BN+ReLU.
    return w_stack.astype(jnp.bfloat16), bn_stack


def pack_features(node_features):
    """Zero-pad node features to the fixed lane width and cast to bf16 (one-time)."""
    n, c_in = node_features.shape
    h0 = jnp.zeros((n, _C_PAD), jnp.float32).at[:, :c_in].set(node_features)
    return h0.astype(jnp.bfloat16)


def build_normalized_adjacency(key, n_nodes):
    """Random symmetric graph with self-loops; DGL 'both' normalization (bf16)."""
    u = jax.random.uniform(key, (n_nodes, n_nodes))
    adj = (u + u.T > 1.4).astype(jnp.float32)                    # symmetric, ~30% dense
    adj = jnp.maximum(adj, jnp.eye(n_nodes, dtype=jnp.float32))  # self-loops (no 0-deg)
    deg_out = adj.sum(axis=1)
    deg_in = adj.sum(axis=0)
    d_out_inv_sqrt = 1.0 / jnp.sqrt(deg_out)
    d_in_inv_sqrt = 1.0 / jnp.sqrt(deg_in)
    # message passing sums over in-edges: aggregation matrix is A^T
    a_norm = d_in_inv_sqrt[:, None] * adj.T * d_out_inv_sqrt[None, :]
    # Stored in bf16 upstream so the kernel DMA is the only pass over A.
    return a_norm.astype(jnp.bfloat16)


if __name__ == "__main__":
    n_nodes = 16
    in_features = 4
    hidden_sizes = [8, 16]
    out_features = 8

    key = jax.random.PRNGKey(0)
    k_adj, k_feat, k_param = jax.random.split(key, 3)

    a_norm = build_normalized_adjacency(k_adj, n_nodes)
    node_features = jax.random.normal(k_feat, (n_nodes, in_features), jnp.float32)
    params, layer_dims = init_params(k_param, in_features, hidden_sizes, out_features)
    w_stack, bn_stack = pack_params(params, layer_dims)
    h0_packed = pack_features(node_features)

    out = gcn_forward(a_norm, h0_packed, w_stack, bn_stack, layer_dims)
    out = jax.block_until_ready(out)
    assert out.shape == (n_nodes, out_features)
    assert bool(jnp.all(jnp.isfinite(out)))
    print("KERNEL_OK")
</pallas_src>

<mosaic_0001>
module attributes {stable_mosaic.version = 11 : i64} {
  func.func @_fused_gcn_kernel(%arg0: memref<16x16xbf16, #tpu.memory_space<vmem>>, %arg1: memref<16x128xbf16, #tpu.memory_space<vmem>>, %arg2: memref<3x128x128xbf16, #tpu.memory_space<vmem>>, %arg3: memref<3x2x128xf32, #tpu.memory_space<vmem>>, %arg4: memref<16x128xf32, #tpu.memory_space<vmem>>) attributes {dimension_semantics = [], scalar_prefetch = 0 : i64, scratch_operands = 0 : i64, tpu.core_type = #tpu.core_type<tc>} {
    %c0 = arith.constant 0 : index
    %c0_0 = arith.constant 0 : index
    %0 = vector.load %arg0[%c0, %c0_0] : memref<16x16xbf16, #tpu.memory_space<vmem>>, vector<16x16xbf16>
    %c0_1 = arith.constant 0 : index
    %c0_2 = arith.constant 0 : index
    %1 = vector.load %arg1[%c0_1, %c0_2] : memref<16x128xbf16, #tpu.memory_space<vmem>>, vector<16x128xbf16>
    %c0_3 = arith.constant 0 : index
    %c0_4 = arith.constant 0 : index
    %c0_5 = arith.constant 0 : index
    %2 = vector.load %arg2[%c0_3, %c0_4, %c0_5] : memref<3x128x128xbf16, #tpu.memory_space<vmem>>, vector<1x128x128xbf16>
    %3 = vector.shape_cast %2 : vector<1x128x128xbf16> to vector<128x128xbf16>
    %cst = arith.constant dense<0.000000e+00> : vector<16x128xf32>
    %4 = tpu.matmul %0, %1, %cst {dimension_numbers = #tpu.dot_dimension_numbers<[1], [0], [0], [1], [0, 0, 1, 1], [], []>} : vector<16x16xbf16>, vector<16x128xbf16>, vector<16x128xf32> -> vector<16x128xf32>
    %5 = arith.truncf %4 : vector<16x128xf32> to vector<16x128xbf16>
    %cst_6 = arith.constant dense<0.000000e+00> : vector<16x128xf32>
    %6 = tpu.matmul %5, %3, %cst_6 {dimension_numbers = #tpu.dot_dimension_numbers<[1], [0], [0], [1], [0, 0, 1, 1], [], []>} : vector<16x128xbf16>, vector<128x128xbf16>, vector<16x128xf32> -> vector<16x128xf32>
    %c0_7 = arith.constant 0 : index
    %c0_8 = arith.constant 0 : index
    %c0_9 = arith.constant 0 : index
    %7 = vector.load %arg3[%c0_7, %c0_8, %c0_9] : memref<3x2x128xf32, #tpu.memory_space<vmem>>, vector<1x1x128xf32>
    %8 = vector.shape_cast %7 : vector<1x1x128xf32> to vector<1x128xf32>
    %c0_10 = arith.constant 0 : index
    %c1 = arith.constant 1 : index
    %c0_11 = arith.constant 0 : index
    %9 = vector.load %arg3[%c0_10, %c1, %c0_11] : memref<3x2x128xf32, #tpu.memory_space<vmem>>, vector<1x1x128xf32>
    %10 = vector.shape_cast %9 : vector<1x1x128xf32> to vector<1x128xf32>
    %cst_12 = arith.constant dense<0.000000e+00> : vector<128xf32>
    %11 = vector.multi_reduction <add>, %6, %cst_12 [0] : vector<16x128xf32> to vector<128xf32>
    %12 = vector.shape_cast %11 : vector<128xf32> to vector<1x128xf32>
    %cst_13 = arith.constant 1.600000e+01 : f32
    %13 = vector.broadcast %cst_13 : f32 to vector<1x128xf32>
    %14 = arith.divf %12, %13 : vector<1x128xf32>
    %15 = vector.broadcast %14 : vector<1x128xf32> to vector<16x128xf32>
    %16 = arith.subf %6, %15 : vector<16x128xf32>
    %17 = arith.mulf %16, %16 : vector<16x128xf32>
    %cst_14 = arith.constant dense<0.000000e+00> : vector<128xf32>
    %18 = vector.multi_reduction <add>, %17, %cst_14 [0] : vector<16x128xf32> to vector<128xf32>
    %19 = vector.shape_cast %18 : vector<128xf32> to vector<1x128xf32>
    %cst_15 = arith.constant 1.600000e+01 : f32
    %20 = vector.broadcast %cst_15 : f32 to vector<1x128xf32>
    %21 = arith.divf %19, %20 : vector<1x128xf32>
    %cst_16 = arith.constant 9.99999974E-6 : f32
    %22 = vector.broadcast %cst_16 : f32 to vector<1x128xf32>
    %23 = arith.addf %21, %22 : vector<1x128xf32>
    %24 = math.rsqrt %23 : vector<1x128xf32>
    %25 = vector.broadcast %24 : vector<1x128xf32> to vector<16x128xf32>
    %26 = arith.mulf %16, %25 : vector<16x128xf32>
    %27 = vector.broadcast %8 : vector<1x128xf32> to vector<16x128xf32>
    %28 = arith.mulf %26, %27 : vector<16x128xf32>
    %29 = vector.broadcast %10 : vector<1x128xf32> to vector<16x128xf32>
    %30 = arith.addf %28, %29 : vector<16x128xf32>
    %cst_17 = arith.constant 0.000000e+00 : f32
    %31 = vector.broadcast %cst_17 : f32 to vector<16x128xf32>
    %32 = arith.maximumf %30, %31 : vector<16x128xf32>
    %c1_18 = arith.constant 1 : index
    %c0_19 = arith.constant 0 : index
    %c0_20 = arith.constant 0 : index
    %33 = vector.load %arg2[%c1_18, %c0_19, %c0_20] : memref<3x128x128xbf16, #tpu.memory_space<vmem>>, vector<1x128x128xbf16>
    %34 = vector.shape_cast %33 : vector<1x128x128xbf16> to vector<128x128xbf16>
    %35 = arith.truncf %32 : vector<16x128xf32> to vector<16x128xbf16>
    %cst_21 = arith.constant dense<0.000000e+00> : vector<16x128xf32>
    %36 = tpu.matmul %0, %35, %cst_21 {dimension_numbers = #tpu.dot_dimension_numbers<[1], [0], [0], [1], [0, 0, 1, 1], [], []>} : vector<16x16xbf16>, vector<16x128xbf16>, vector<16x128xf32> -> vector<16x128xf32>
    %37 = arith.truncf %36 : vector<16x128xf32> to vector<16x128xbf16>
    %cst_22 = arith.constant dense<0.000000e+00> : vector<16x128xf32>
    %38 = tpu.matmul %37, %34, %cst_22 {dimension_numbers = #tpu.dot_dimension_numbers<[1], [0], [0], [1], [0, 0, 1, 1], [], []>} : vector<16x128xbf16>, vector<128x128xbf16>, vector<16x128xf32> -> vector<16x128xf32>
    %c1_23 = arith.constant 1 : index
    %c0_24 = arith.constant 0 : index
    %c0_25 = arith.constant 0 : index
    %39 = vector.load %arg3[%c1_23, %c0_24, %c0_25] : memref<3x2x128xf32, #tpu.memory_space<vmem>>, vector<1x1x128xf32>
    %40 = vector.shape_cast %39 : vector<1x1x128xf32> to vector<1x128xf32>
    %c1_26 = arith.constant 1 : index
    %c1_27 = arith.constant 1 : index
    %c0_28 = arith.constant 0 : index
    %41 = vector.load %arg3[%c1_26, %c1_27, %c0_28] : memref<3x2x128xf32, #tpu.memory_space<vmem>>, vector<1x1x128xf32>
    %42 = vector.shape_cast %41 : vector<1x1x128xf32> to vector<1x128xf32>
    %cst_29 = arith.constant dense<0.000000e+00> : vector<128xf32>
    %43 = vector.multi_reduction <add>, %38, %cst_29 [0] : vector<16x128xf32> to vector<128xf32>
    %44 = vector.shape_cast %43 : vector<128xf32> to vector<1x128xf32>
    %cst_30 = arith.constant 1.600000e+01 : f32
    %45 = vector.broadcast %cst_30 : f32 to vector<1x128xf32>
    %46 = arith.divf %44, %45 : vector<1x128xf32>
    %47 = vector.broadcast %46 : vector<1x128xf32> to vector<16x128xf32>
    %48 = arith.subf %38, %47 : vector<16x128xf32>
    %49 = arith.mulf %48, %48 : vector<16x128xf32>
    %cst_31 = arith.constant dense<0.000000e+00> : vector<128xf32>
    %50 = vector.multi_reduction <add>, %49, %cst_31 [0] : vector<16x128xf32> to vector<128xf32>
    %51 = vector.shape_cast %50 : vector<128xf32> to vector<1x128xf32>
    %cst_32 = arith.constant 1.600000e+01 : f32
    %52 = vector.broadcast %cst_32 : f32 to vector<1x128xf32>
    %53 = arith.divf %51, %52 : vector<1x128xf32>
    %cst_33 = arith.constant 9.99999974E-6 : f32
    %54 = vector.broadcast %cst_33 : f32 to vector<1x128xf32>
    %55 = arith.addf %53, %54 : vector<1x128xf32>
    %56 = math.rsqrt %55 : vector<1x128xf32>
    %57 = vector.broadcast %56 : vector<1x128xf32> to vector<16x128xf32>
    %58 = arith.mulf %48, %57 : vector<16x128xf32>
    %59 = vector.broadcast %40 : vector<1x128xf32> to vector<16x128xf32>
    %60 = arith.mulf %58, %59 : vector<16x128xf32>
    %61 = vector.broadcast %42 : vector<1x128xf32> to vector<16x128xf32>
    %62 = arith.addf %60, %61 : vector<16x128xf32>
    %cst_34 = arith.constant 0.000000e+00 : f32
    %63 = vector.broadcast %cst_34 : f32 to vector<16x128xf32>
    %64 = arith.maximumf %62, %63 : vector<16x128xf32>
    %c2 = arith.constant 2 : index
    %c0_35 = arith.constant 0 : index
    %c0_36 = arith.constant 0 : index
    %65 = vector.load %arg2[%c2, %c0_35, %c0_36] : memref<3x128x128xbf16, #tpu.memory_space<vmem>>, vector<1x128x128xbf16>
    %66 = vector.shape_cast %65 : vector<1x128x128xbf16> to vector<128x128xbf16>
    %67 = arith.truncf %64 : vector<16x128xf32> to vector<16x128xbf16>
    %cst_37 = arith.constant dense<0.000000e+00> : vector<16x128xf32>
    %68 = tpu.matmul %0, %67, %cst_37 {dimension_numbers = #tpu.dot_dimension_numbers<[1], [0], [0], [1], [0, 0, 1, 1], [], []>} : vector<16x16xbf16>, vector<16x128xbf16>, vector<16x128xf32> -> vector<16x128xf32>
    %69 = arith.truncf %68 : vector<16x128xf32> to vector<16x128xbf16>
    %cst_38 = arith.constant dense<0.000000e+00> : vector<16x128xf32>
    %70 = tpu.matmul %69, %66, %cst_38 {dimension_numbers = #tpu.dot_dimension_numbers<[1], [0], [0], [1], [0, 0, 1, 1], [], []>} : vector<16x128xbf16>, vector<128x128xbf16>, vector<16x128xf32> -> vector<16x128xf32>
    %c2_39 = arith.constant 2 : index
    %c0_40 = arith.constant 0 : index
    %c0_41 = arith.constant 0 : index
    %71 = vector.load %arg3[%c2_39, %c0_40, %c0_41] : memref<3x2x128xf32, #tpu.memory_space<vmem>>, vector<1x1x128xf32>
    %72 = vector.shape_cast %71 : vector<1x1x128xf32> to vector<1x128xf32>
    %c2_42 = arith.constant 2 : index
    %c1_43 = arith.constant 1 : index
    %c0_44 = arith.constant 0 : index
    %73 = vector.load %arg3[%c2_42, %c1_43, %c0_44] : memref<3x2x128xf32, #tpu.memory_space<vmem>>, vector<1x1x128xf32>
    %74 = vector.shape_cast %73 : vector<1x1x128xf32> to vector<1x128xf32>
    %cst_45 = arith.constant dense<0.000000e+00> : vector<128xf32>
    %75 = vector.multi_reduction <add>, %70, %cst_45 [0] : vector<16x128xf32> to vector<128xf32>
    %76 = vector.shape_cast %75 : vector<128xf32> to vector<1x128xf32>
    %cst_46 = arith.constant 1.600000e+01 : f32
    %77 = vector.broadcast %cst_46 : f32 to vector<1x128xf32>
    %78 = arith.divf %76, %77 : vector<1x128xf32>
    %79 = vector.broadcast %78 : vector<1x128xf32> to vector<16x128xf32>
    %80 = arith.subf %70, %79 : vector<16x128xf32>
    %81 = arith.mulf %80, %80 : vector<16x128xf32>
    %cst_47 = arith.constant dense<0.000000e+00> : vector<128xf32>
    %82 = vector.multi_reduction <add>, %81, %cst_47 [0] : vector<16x128xf32> to vector<128xf32>
    %83 = vector.shape_cast %82 : vector<128xf32> to vector<1x128xf32>
    %cst_48 = arith.constant 1.600000e+01 : f32
    %84 = vector.broadcast %cst_48 : f32 to vector<1x128xf32>
    %85 = arith.divf %83, %84 : vector<1x128xf32>
    %cst_49 = arith.constant 9.99999974E-6 : f32
    %86 = vector.broadcast %cst_49 : f32 to vector<1x128xf32>
    %87 = arith.addf %85, %86 : vector<1x128xf32>
    %88 = math.rsqrt %87 : vector<1x128xf32>
    %89 = vector.broadcast %88 : vector<1x128xf32> to vector<16x128xf32>
    %90 = arith.mulf %80, %89 : vector<16x128xf32>
    %91 = vector.broadcast %72 : vector<1x128xf32> to vector<16x128xf32>
    %92 = arith.mulf %90, %91 : vector<16x128xf32>
    %93 = vector.broadcast %74 : vector<1x128xf32> to vector<16x128xf32>
    %94 = arith.addf %92, %93 : vector<16x128xf32>
    %cst_50 = arith.constant 0.000000e+00 : f32
    %95 = vector.broadcast %cst_50 : f32 to vector<16x128xf32>
    %96 = arith.maximumf %94, %95 : vector<16x128xf32>
    %c0_51 = arith.constant 0 : index
    %c0_52 = arith.constant 0 : index
    %97 = vector.load %arg4[%c0_51, %c0_52] : memref<16x128xf32, #tpu.memory_space<vmem>>, vector<16x128xf32>
    tpu.vector_store %arg4[%c0_51, %c0_52], %96 {strides = array<i32>} : memref<16x128xf32, #tpu.memory_space<vmem>>, vector<16x128xf32>,
    return
  }
}

</mosaic_0001>

<llo_original>
// kernel: tpu_custom_call.1
$region0: #{tpu_custom_call.1}
  #allocation0 [shape = 'u32[]', space=smem, size = 0x4, offset = 0x4, fixed_abs, tag = 'smem constant byte address 0x4 - core index']
  #allocation1 [shape = 'u32[72,128]{1,0:T(1,128)}', space=vmem, size = 0x9000, scoped, tag = 'internal scratch']
  %s0 = inlined_call_operand.hbm [shape: bf16[16,16], index: 0, kind: input, shape index: {}]
  %s1 = inlined_call_operand.hbm [shape: bf16[16,128], index: 1, kind: input, shape index: {}]
  %s2 = inlined_call_operand.hbm [shape: bf16[3,128,128], index: 2, kind: input, shape index: {}]
  %s3 = inlined_call_operand.hbm [shape: f32[3,2,128], index: 3, kind: input, shape index: {}]
  %s4 = inlined_call_operand.hbm [shape: f32[16,128], index: 4, kind: output, shape index: {}]
  %s5 = sld [smem:[#allocation0]]
  $region42: #{tpu_custom_call.1} parent=0
    _
  %s7 = ssub.s32 1, %s5
  %s8 = scalar_select 0, %s7, %s5
  $region1: #{tpu_custom_call.1} parent=0
    #allocation2 [shape = 'u8[4096]{0}', space=vmem, size = 0x1000, scoped, tag = 'input window, operand 0, single buffered']
    #allocation3 [shape = 's32[1]{0}', space=sflag, size = 0x4, scoped, tag = 'scoped memory for tpu_custom_call.1']
    #allocation4 [shape = 's32[1]{0}', space=sflag, size = 0x4, scoped, tag = 'scoped memory for tpu_custom_call.1']
    #allocation5 [shape = 'u8[4096]{0}', space=vmem, size = 0x1000, scoped, tag = 'input window, operand 1, single buffered']
    #allocation6 [shape = 's32[1]{0}', space=sflag, size = 0x4, scoped, tag = 'scoped memory for tpu_custom_call.1']
    #allocation7 [shape = 'u8[98304]{0}', space=vmem, size = 0x18000, scoped, tag = 'input window, operand 2, single buffered']
    #allocation8 [shape = 'u8[3072]{0}', space=vmem, size = 0xc00, scoped, tag = 'input window, operand 3, single buffered']
    #allocation9 [shape = 's32[1]{0}', space=sflag, size = 0x4, scoped, tag = 'scoped memory for tpu_custom_call.1']
    #allocation10 [shape = 'u8[8192]{0}', space=vmem, size = 0x2000, scoped, tag = 'output window, operand 0, single buffered']
    %9 = vsyncpa [#allocation3], 0
    %10 = vsyncpa [#allocation6], 0
    %11 = vsyncpa [#allocation9], 0
    %12 = vsyncpa [#allocation4], 0
    // Predicated region
    $region2: #{tpu_custom_call.1} parent=1 // pred_check
      _
    $region3: #{tpu_custom_call.1} parent=1 // pred_check_branch
      %14 = sbr.rel (0) target = $region5
    $region4: #{tpu_custom_call.1} parent=1 // pred_region
      %16 = vsyncadd [#allocation3], 0
      %s17 = sshll.u32 %s0, 4
      %s18 = int_to_ptr.hbm [resolvable:$true] %s17
      %s19 = sshll.u32 [#allocation2], 4
      %s20 = int_to_ptr.vmem [resolvable:$true] %s19
      %25 = dma.hbm_to_vmem [thread:$0]  %s18, 128, %s20, [#allocation3], 64, 64, 4
    $region5: #{tpu_custom_call.1} parent=1 // pred_fallthru
      _
    // Predicated region
    $region6: #{tpu_custom_call.1} parent=1 // pred_check
      _
    $region7: #{tpu_custom_call.1} parent=1 // pred_check_branch
      %27 = sbr.rel (0) target = $region9
    $region8: #{tpu_custom_call.1} parent=1 // pred_region
      %29 = vsyncadd [#allocation6], 0
      %s30 = sshll.u32 %s1, 4
      %s31 = int_to_ptr.hbm [resolvable:$true] %s30
      %s32 = sshll.u32 [#allocation5], 4
      %s33 = int_to_ptr.vmem [resolvable:$true] %s32
      %38 = dma.hbm_to_vmem [thread:$0]  %s31, 128, %s33, [#allocation6], 64, 64, 4
    $region9: #{tpu_custom_call.1} parent=1 // pred_fallthru
      _
    // Predicated region
    $region10: #{tpu_custom_call.1} parent=1 // pred_check
      _
    $region11: #{tpu_custom_call.1} parent=1 // pred_check_branch
      %40 = sbr.rel (0) target = $region13
    $region12: #{tpu_custom_call.1} parent=1 // pred_region
      %42 = vsyncadd [#allocation6], 0
      %s43 = sshll.u32 %s2, 4
      %s44 = int_to_ptr.hbm [resolvable:$true] %s43
      %s45 = sshll.u32 [#allocation7], 4
      %s46 = int_to_ptr.vmem [resolvable:$true] %s45
      %51 = dma.hbm_to_vmem [thread:$0]  %s44, 3072, %s46, [#allocation6], 64, 64, 4
    $region13: #{tpu_custom_call.1} parent=1 // pred_fallthru
      _
    // Predicated region
    $region14: #{tpu_custom_call.1} parent=1 // pred_check
      _
    $region15: #{tpu_custom_call.1} parent=1 // pred_check_branch
      %53 = sbr.rel (0) target = $region17
    $region16: #{tpu_custom_call.1} parent=1 // pred_region
      %55 = vsyncadd [#allocation9], 0
      %s56 = sshll.u32 %s3, 4
      %s57 = int_to_ptr.hbm [resolvable:$true] %s56
      %s58 = sshll.u32 [#allocation8], 4
      %s59 = int_to_ptr.vmem [resolvable:$true] %s58
      %64 = dma.hbm_to_vmem [thread:$0]  %s57, 96, %s59, [#allocation9], 32, 32, 2
    $region17: #{tpu_custom_call.1} parent=1 // pred_fallthru
      _
    // Predicated region
    $region18: #{tpu_custom_call.1} parent=1 // pred_check
      _
    $region19: #{tpu_custom_call.1} parent=1 // pred_check_branch
      %66 = sbr.rel (0) target = $region21
    $region20: #{tpu_custom_call.1} parent=1 // pred_region
      %68 = dma.done [#allocation3], 128
    $region21: #{tpu_custom_call.1} parent=1 // pred_fallthru
      _
    // Predicated region
    $region22: #{tpu_custom_call.1} parent=1 // pred_check
      _
    $region23: #{tpu_custom_call.1} parent=1 // pred_check_branch
      %70 = sbr.rel (0) target = $region25
    $region24: #{tpu_custom_call.1} parent=1 // pred_region
      %72 = dma.done [#allocation6], 128
    $region25: #{tpu_custom_call.1} parent=1 // pred_fallthru
      _
    // Predicated region
    $region26: #{tpu_custom_call.1} parent=1 // pred_check
      _
    $region27: #{tpu_custom_call.1} parent=1 // pred_check_branch
      %74 = sbr.rel (0) target = $region29
    $region28: #{tpu_custom_call.1} parent=1 // pred_region
      %76 = dma.done [#allocation6], 3072
    $region29: #{tpu_custom_call.1} parent=1 // pred_fallthru
      _
    // Predicated region
    $region30: #{tpu_custom_call.1} parent=1 // pred_check
      _
    $region31: #{tpu_custom_call.1} parent=1 // pred_check_branch
      %78 = sbr.rel (0) target = $region33
    $region32: #{tpu_custom_call.1} parent=1 // pred_region
      %80 = dma.done [#allocation9], 96
    $region33: #{tpu_custom_call.1} parent=1 // pred_fallthru
      _
    %v82 = vld [vmem:[#allocation2] sm:$0xf]
    %v83 = vld [vmem:[#allocation2 + $0x4] sm:$0xf]
    %v84 = vld [vmem:[#allocation5] sm:$0xf]
    %v85 = vld [vmem:[#allocation5 + $0x4] sm:$0xf]
    %v86 = vld [vmem:[#allocation7] sm:$0xf]
    %v87 = vld [vmem:[#allocation7 + $0x4] sm:$0xf]
    %v88 = vld [vmem:[#allocation7 + $0x8] sm:$0xf]
    %v89 = vld [vmem:[#allocation7 + $0xc] sm:$0xf]
    %v90 = vld [vmem:[#allocation7 + $0x10] sm:$0xf]
    %v91 = vld [vmem:[#allocation7 + $0x14] sm:$0xf]
    %v92 = vld [vmem:[#allocation7 + $0x18] sm:$0xf]
    %v93 = vld [vmem:[#allocation7 + $0x1c] sm:$0xf]
    %v94 = vld [vmem:[#allocation7 + $0x20] sm:$0xf]
    %v95 = vld [vmem:[#allocation7 + $0x24] sm:$0xf]
    %v96 = vld [vmem:[#allocation7 + $0x28] sm:$0xf]
    %v97 = vld [vmem:[#allocation7 + $0x2c] sm:$0xf]
    %v98 = vld [vmem:[#allocation7 + $0x30] sm:$0xf]
    %v99 = vld [vmem:[#allocation7 + $0x34] sm:$0xf]
    %v100 = vld [vmem:[#allocation7 + $0x38] sm:$0xf]
    %v101 = vld [vmem:[#allocation7 + $0x3c] sm:$0xf]
    %v104 = vunpack.c.l.b16 %v82
    %v105 = vunpack.c.l.b16 %v83
    %v106 = vpack.c.b16 %v105, %v104
    %v109 = vunpack.c.l.b16 %v84
    %v110 = vunpack.c.l.b16 %v85
    %v111 = vpack.c.b16 %v110, %v109
    %vm113 = vcmask 130048
    %v115 = vsel %vm113, %v106, 0
    %117 = vmatpush.bf16.msra.mxu0 0
    %118 = vmatpush.bf16.msra.mxu0 0
    %119 = vmatpush.bf16.msra.mxu0 0
    %120 = vmatpush.bf16.msra.mxu0 0
    %121 = vmatpush.bf16.msra.mxu0 0
    %122 = vmatpush.bf16.msra.mxu0 0
    %123 = vmatpush.bf16.msra.mxu0 0
    %124 = vmatpush.bf16.msra.mxu0 %v111
    %125 = vmatmul.bf16.gmra.mxu0 %v115
    %v126 = vpop.f32.mrf.mxu0
    %v127 = vadd.f32 0.0, %v126
    %v128 = vpop.f32.mrf.mxu0
    %v129 = vadd.f32 0.0, %v128
    %130 = vdwg.mxu0
    %v131 = vpack.c.bf16 %v129, %v127
    %v148 = vunpack.c.l.b16 %v86
    %v149 = vunpack.c.l.b16 %v87
    %v150 = vunpack.c.l.b16 %v88
    %v151 = vunpack.c.l.b16 %v89
    %v152 = vunpack.c.l.b16 %v90
    %v153 = vunpack.c.l.b16 %v91
    %v154 = vunpack.c.l.b16 %v92
    %v155 = vunpack.c.l.b16 %v93
    %v156 = vunpack.c.l.b16 %v94
    %v157 = vunpack.c.l.b16 %v95
    %v158 = vunpack.c.l.b16 %v96
    %v159 = vunpack.c.l.b16 %v97
    %v160 = vunpack.c.l.b16 %v98
    %v161 = vunpack.c.l.b16 %v99
    %v162 = vunpack.c.l.b16 %v100
    %v163 = vunpack.c.l.b16 %v101
    %v164 = vpack.c.b16 %v149, %v148
    %v165 = vpack.c.b16 %v151, %v150
    %v166 = vpack.c.b16 %v153, %v152
    %v167 = vpack.c.b16 %v155, %v154
    %v168 = vpack.c.b16 %v157, %v156
    %v169 = vpack.c.b16 %v159, %v158
    %v170 = vpack.c.b16 %v161, %v160
    %v171 = vpack.c.b16 %v163, %v162
    %180 = vmatpush.bf16.msra.mxu0 %v171
    %181 = vmatpush.bf16.msra.mxu0 %v170
    %182 = vmatpush.bf16.msra.mxu0 %v169
    %183 = vmatpush.bf16.msra.mxu0 %v168
    %184 = vmatpush.bf16.msra.mxu0 %v167
    %185 = vmatpush.bf16.msra.mxu0 %v166
    %186 = vmatpush.bf16.msra.mxu0 %v165
    %187 = vmatpush.bf16.msra.mxu0 %v164
    %188 = vmatmul.bf16.gmra.mxu0 %v131
    %v189 = vpop.f32.mrf.mxu0
    %v190 = vadd.f32 0.0, %v189
    %v191 = vpop.f32.mrf.mxu0
    %v192 = vadd.f32 0.0, %v191
    %193 = vdwg.mxu0
    %v194 = vld [vmem:[#allocation8] sm:$0x1]
    %v195 = vld [vmem:[#allocation8 + $0x1] sm:$0x1]
    %v196 = vadd.f32 %v190, %v192
    %v197 = vrot.slane %v196, 4
    %v198 = vadd.f32 %v196, %v197
    %v199 = vrot.slane %v198, 2
    %v200 = vadd.f32 %v198, %v199
    %v201 = vrot.slane %v200, 1
    %v202 = vadd.f32 %v200, %v201
    %v203 = vrcp.pop 16.0
    %v204 = vmul.f32 16.0, %v203
    %v205 = vsub.f32 1.0, %v204
    %v206 = vmul.f32 %v203, %v205
    %v207 = vadd.f32 %v203, %v206
    %vm208 = vweird.f32 %v203
    %v209 = vsel %vm208, %v203, %v207
    %v210 = vmul.f32 %v202, %v209
    %v211 = vsub.f32 %v190, %v210
    %v212 = vsub.f32 %v192, %v210
    %v213 = vmul.f32 %v211, %v211
    %v214 = vmul.f32 %v212, %v212
    %v215 = vadd.f32 %v213, %v214
    %v216 = vrot.slane %v215, 4
    %v217 = vadd.f32 %v215, %v216
    %v218 = vrot.slane %v217, 2
    %v219 = vadd.f32 %v217, %v218
    %v220 = vrot.slane %v219, 1
    %v221 = vadd.f32 %v219, %v220
    %v222 = vmul.f32 %v221, %v209
    %v223 = vadd.f32 %v222, 1e-05
    %v224 = vrsqrt.pop %v223
    %v225 = vmul.f32 %v224, %v223
    %v226 = vmul.f32 %v225, %v224
    %v227 = vmul.f32 0.5, %v226
    %v228 = vsub.f32 1.5, %v227
    %v229 = vmul.f32 %v224, %v228
    %vm230 = vweird.f32 %v223
    %vm231 = vweird.f32 %v224
    %vm232 = vmor %vm230, %vm231
    %v233 = vsel %vm232, %v224, %v229
    %v234 = vmul.f32 %v211, %v233
    %v235 = vmul.f32 %v212, %v233
    %v236 = vperm.slane %v194, 0
    %v237 = vmul.f32 %v234, %v236
    %v238 = vmul.f32 %v235, %v236
    %v239 = vperm.slane %v195, 0
    %v240 = vadd.f32 %v237, %v239
    %v241 = vadd.f32 %v238, %v239
    %v242 = vmax.f32 %v240, 0.0
    %v243 = vmax.f32 %v241, 0.0
    %s244 = scalar_lea.vmem [#allocation7], 64
    %v245 = vld [vmem:[%s244] sm:$0xf]
    %v246 = vld [vmem:[%s244 + $0x4] sm:$0xf]
    %v247 = vld [vmem:[%s244 + $0x8] sm:$0xf]
    %v248 = vld [vmem:[%s244 + $0xc] sm:$0xf]
    %v249 = vld [vmem:[%s244 + $0x10] sm:$0xf]
    %v250 = vld [vmem:[%s244 + $0x14] sm:$0xf]
    %v251 = vld [vmem:[%s244 + $0x18] sm:$0xf]
    %v252 = vld [vmem:[%s244 + $0x1c] sm:$0xf]
    %v253 = vld [vmem:[%s244 + $0x20] sm:$0xf]
    %v254 = vld [vmem:[%s244 + $0x24] sm:$0xf]
    %v255 = vld [vmem:[%s244 + $0x28] sm:$0xf]
    %v256 = vld [vmem:[%s244 + $0x2c] sm:$0xf]
    %v257 = vld [vmem:[%s244 + $0x30] sm:$0xf]
    %v258 = vld [vmem:[%s244 + $0x34] sm:$0xf]
    %v259 = vld [vmem:[%s244 + $0x38] sm:$0xf]
    %v260 = vld [vmem:[%s244 + $0x3c] sm:$0xf]
    %v261 = vpack.c.bf16 %v243, %v242
    %262 = vmatpush.bf16.msra.mxu0 0
    %263 = vmatpush.bf16.msra.mxu0 0
    %264 = vmatpush.bf16.msra.mxu0 0
    %265 = vmatpush.bf16.msra.mxu0 0
    %266 = vmatpush.bf16.msra.mxu0 0
    %267 = vmatpush.bf16.msra.mxu0 0
    %268 = vmatpush.bf16.msra.mxu0 0
    %269 = vmatpush.bf16.msra.mxu0 %v261
    %270 = vmatmul.bf16.gmra.mxu0 %v115
    %v271 = vpop.f32.mrf.mxu0
    %v272 = vadd.f32 0.0, %v271
    %v273 = vpop.f32.mrf.mxu0
    %v274 = vadd.f32 0.0, %v273
    %275 = vdwg.mxu0
    %v276 = vpack.c.bf16 %v274, %v272
    %v293 = vunpack.c.l.b16 %v245
    %v294 = vunpack.c.l.b16 %v246
    %v295 = vunpack.c.l.b16 %v247
    %v296 = vunpack.c.l.b16 %v248
    %v297 = vunpack.c.l.b16 %v249
    %v298 = vunpack.c.l.b16 %v250
    %v299 = vunpack.c.l.b16 %v251
    %v300 = vunpack.c.l.b16 %v252
    %v301 = vunpack.c.l.b16 %v253
    %v302 = vunpack.c.l.b16 %v254
    %v303 = vunpack.c.l.b16 %v255
    %v304 = vunpack.c.l.b16 %v256
    %v305 = vunpack.c.l.b16 %v257
    %v306 = vunpack.c.l.b16 %v258
    %v307 = vunpack.c.l.b16 %v259
    %v308 = vunpack.c.l.b16 %v260
    %v309 = vpack.c.b16 %v294, %v293
    %v310 = vpack.c.b16 %v296, %v295
    %v311 = vpack.c.b16 %v298, %v297
    %v312 = vpack.c.b16 %v300, %v299
    %v313 = vpack.c.b16 %v302, %v301
    %v314 = vpack.c.b16 %v304, %v303
    %v315 = vpack.c.b16 %v306, %v305
    %v316 = vpack.c.b16 %v308, %v307
    %325 = vmatpush.bf16.msra.mxu0 %v316
    %326 = vmatpush.bf16.msra.mxu0 %v315
    %327 = vmatpush.bf16.msra.mxu0 %v314
    %328 = vmatpush.bf16.msra.mxu0 %v313
    %329 = vmatpush.bf16.msra.mxu0 %v312
    %330 = vmatpush.bf16.msra.mxu0 %v311
    %331 = vmatpush.bf16.msra.mxu0 %v310
    %332 = vmatpush.bf16.msra.mxu0 %v309
    %333 = vmatmul.bf16.gmra.mxu0 %v276
    %v334 = vpop.f32.mrf.mxu0
    %v335 = vadd.f32 0.0, %v334
    %v336 = vpop.f32.mrf.mxu0
    %v337 = vadd.f32 0.0, %v336
    %338 = vdwg.mxu0
    %s339 = scalar_lea.vmem [#allocation8], 2
    %v340 = vld [vmem:[%s339] sm:$0x1]
    %v341 = vld [vmem:[%s339 + $0x1] sm:$0x1]
    %v342 = vadd.f32 %v335, %v337
    %v343 = vrot.slane %v342, 4
    %v344 = vadd.f32 %v342, %v343
    %v345 = vrot.slane %v344, 2
    %v346 = vadd.f32 %v344, %v345
    %v347 = vrot.slane %v346, 1
    %v348 = vadd.f32 %v346, %v347
    %v349 = vmul.f32 %v348, %v209
    %v350 = vsub.f32 %v335, %v349
    %v351 = vsub.f32 %v337, %v349
    %v352 = vmul.f32 %v350, %v350
    %v353 = vmul.f32 %v351, %v351
    %v354 = vadd.f32 %v352, %v353
    %v355 = vrot.slane %v354, 4
    %v356 = vadd.f32 %v354, %v355
    %v357 = vrot.slane %v356, 2
    %v358 = vadd.f32 %v356, %v357
    %v359 = vrot.slane %v358, 1
    %v360 = vadd.f32 %v358, %v359
    %v361 = vmul.f32 %v360, %v209
    %v362 = vadd.f32 %v361, 1e-05
    %v363 = vrsqrt.pop %v362
    %v364 = vmul.f32 %v363, %v362
    %v365 = vmul.f32 %v364, %v363
    %v366 = vmul.f32 0.5, %v365
    %v367 = vsub.f32 1.5, %v366
    %v368 = vmul.f32 %v363, %v367
    %vm369 = vweird.f32 %v362
    %vm370 = vweird.f32 %v363
    %vm371 = vmor %vm369, %vm370
    %v372 = vsel %vm371, %v363, %v368
    %v373 = vmul.f32 %v350, %v372
    %v374 = vmul.f32 %v351, %v372
    %v375 = vperm.slane %v340, 0
    %v376 = vmul.f32 %v373, %v375
    %v377 = vmul.f32 %v374, %v375
    %v378 = vperm.slane %v341, 0
    %v379 = vadd.f32 %v376, %v378
    %v380 = vadd.f32 %v377, %v378
    %v381 = vmax.f32 %v379, 0.0
    %v382 = vmax.f32 %v380, 0.0
    %s383 = scalar_lea.vmem [#allocation7], 128
    %v384 = vld [vmem:[%s383] sm:$0xf]
    %v385 = vld [vmem:[%s383 + $0x4] sm:$0xf]
    %v386 = vld [vmem:[%s383 + $0x8] sm:$0xf]
    %v387 = vld [vmem:[%s383 + $0xc] sm:$0xf]
    %v388 = vld [vmem:[%s383 + $0x10] sm:$0xf]
    %v389 = vld [vmem:[%s383 + $0x14] sm:$0xf]
    %v390 = vld [vmem:[%s383 + $0x18] sm:$0xf]
    %v391 = vld [vmem:[%s383 + $0x1c] sm:$0xf]
    %v392 = vld [vmem:[%s383 + $0x20] sm:$0xf]
    %v393 = vld [vmem:[%s383 + $0x24] sm:$0xf]
    %v394 = vld [vmem:[%s383 + $0x28] sm:$0xf]
    %v395 = vld [vmem:[%s383 + $0x2c] sm:$0xf]
    %v396 = vld [vmem:[%s383 + $0x30] sm:$0xf]
    %v397 = vld [vmem:[%s383 + $0x34] sm:$0xf]
    %v398 = vld [vmem:[%s383 + $0x38] sm:$0xf]
    %v399 = vld [vmem:[%s383 + $0x3c] sm:$0xf]
    %v400 = vpack.c.bf16 %v382, %v381
    %401 = vmatpush.bf16.msra.mxu0 0
    %402 = vmatpush.bf16.msra.mxu0 0
    %403 = vmatpush.bf16.msra.mxu0 0
    %404 = vmatpush.bf16.msra.mxu0 0
    %405 = vmatpush.bf16.msra.mxu0 0
    %406 = vmatpush.bf16.msra.mxu0 0
    %407 = vmatpush.bf16.msra.mxu0 0
    %408 = vmatpush.bf16.msra.mxu0 %v400
    %409 = vmatmul.bf16.gmra.mxu0 %v115
    %v410 = vpop.f32.mrf.mxu0
    %v411 = vadd.f32 0.0, %v410
    %v412 = vpop.f32.mrf.mxu0
    %v413 = vadd.f32 0.0, %v412
    %414 = vdwg.mxu0
    %v415 = vpack.c.bf16 %v413, %v411
    %v432 = vunpack.c.l.b16 %v384
    %v433 = vunpack.c.l.b16 %v385
    %v434 = vunpack.c.l.b16 %v386
    %v435 = vunpack.c.l.b16 %v387
    %v436 = vunpack.c.l.b16 %v388
    %v437 = vunpack.c.l.b16 %v389
    %v438 = vunpack.c.l.b16 %v390
    %v439 = vunpack.c.l.b16 %v391
    %v440 = vunpack.c.l.b16 %v392
    %v441 = vunpack.c.l.b16 %v393
    %v442 = vunpack.c.l.b16 %v394
    %v443 = vunpack.c.l.b16 %v395
    %v444 = vunpack.c.l.b16 %v396
    %v445 = vunpack.c.l.b16 %v397
    %v446 = vunpack.c.l.b16 %v398
    %v447 = vunpack.c.l.b16 %v399
    %v448 = vpack.c.b16 %v433, %v432
    %v449 = vpack.c.b16 %v435, %v434
    %v450 = vpack.c.b16 %v437, %v436
    %v451 = vpack.c.b16 %v439, %v438
    %v452 = vpack.c.b16 %v441, %v440
    %v453 = vpack.c.b16 %v443, %v442
    %v454 = vpack.c.b16 %v445, %v444
    %v455 = vpack.c.b16 %v447, %v446
    %464 = vmatpush.bf16.msra.mxu0 %v455
    %465 = vmatpush.bf16.msra.mxu0 %v454
    %466 = vmatpush.bf16.msra.mxu0 %v453
    %467 = vmatpush.bf16.msra.mxu0 %v452
    %468 = vmatpush.bf16.msra.mxu0 %v451
    %469 = vmatpush.bf16.msra.mxu0 %v450
    %470 = vmatpush.bf16.msra.mxu0 %v449
    %471 = vmatpush.bf16.msra.mxu0 %v448
    %472 = vmatmul.bf16.gmra.mxu0 %v415
    %v473 = vpop.f32.mrf.mxu0
    %v474 = vadd.f32 0.0, %v473
    %v475 = vpop.f32.mrf.mxu0
    %v476 = vadd.f32 0.0, %v475
    %477 = vdwg.mxu0
    %s478 = scalar_lea.vmem [#allocation8], 4
    %v479 = vld [vmem:[%s478] sm:$0x1]
    %v480 = vld [vmem:[%s478 + $0x1] sm:$0x1]
    %v481 = vadd.f32 %v474, %v476
    %v482 = vrot.slane %v481, 4
    %v483 = vadd.f32 %v481, %v482
    %v484 = vrot.slane %v483, 2
    %v485 = vadd.f32 %v483, %v484
    %v486 = vrot.slane %v485, 1
    %v487 = vadd.f32 %v485, %v486
    %v488 = vmul.f32 %v487, %v209
    %v489 = vsub.f32 %v474, %v488
    %v490 = vsub.f32 %v476, %v488
    %v491 = vmul.f32 %v489, %v489
    %v492 = vmul.f32 %v490, %v490
    %v493 = vadd.f32 %v491, %v492
    %v494 = vrot.slane %v493, 4
    %v495 = vadd.f32 %v493, %v494
    %v496 = vrot.slane %v495, 2
    %v497 = vadd.f32 %v495, %v496
    %v498 = vrot.slane %v497, 1
    %v499 = vadd.f32 %v497, %v498
    %v500 = vmul.f32 %v499, %v209
    %v501 = vadd.f32 %v500, 1e-05
    %v502 = vrsqrt.pop %v501
    %v503 = vmul.f32 %v502, %v501
    %v504 = vmul.f32 %v503, %v502
    %v505 = vmul.f32 0.5, %v504
    %v506 = vsub.f32 1.5, %v505
    %v507 = vmul.f32 %v502, %v506
    %vm508 = vweird.f32 %v501
    %vm509 = vweird.f32 %v502
    %vm510 = vmor %vm508, %vm509
    %v511 = vsel %vm510, %v502, %v507
    %v512 = vmul.f32 %v489, %v511
    %v513 = vmul.f32 %v490, %v511
    %v514 = vperm.slane %v479, 0
    %v515 = vmul.f32 %v512, %v514
    %v516 = vmul.f32 %v513, %v514
    %v517 = vperm.slane %v480, 0
    %v518 = vadd.f32 %v515, %v517
    %v519 = vadd.f32 %v516, %v517
    %v520 = vmax.f32 %v518, 0.0
    %v521 = vmax.f32 %v519, 0.0
    %522 = vst [vmem:[#allocation10] sm:$0xff] %v520
    %523 = vst [vmem:[#allocation10 + $0x8] sm:$0xff] %v521
    // Predicated region
    $region34: #{tpu_custom_call.1} parent=1 // pred_check
      _
    $region35: #{tpu_custom_call.1} parent=1 // pred_check_branch
      %525 = sbr.rel (0) target = $region37
    $region36: #{tpu_custom_call.1} parent=1 // pred_region
      %527 = vsyncadd [#allocation4], 0
      %s528 = sshll.u32 [#allocation10], 4
      %s529 = int_to_ptr.vmem [resolvable:$true] %s528
      %s530 = sshll.u32 %s4, 4
      %s531 = int_to_ptr.hbm [resolvable:$true] %s530
      %536 = dma.vmem_to_hbm [thread:$0]  %s529, 256, %s531, [#allocation4], 128, 128, 8
    $region37: #{tpu_custom_call.1} parent=1 // pred_fallthru
      _
    // Predicated region
    $region38: #{tpu_custom_call.1} parent=1 // pred_check
      _
    $region39: #{tpu_custom_call.1} parent=1 // pred_check_branch
      %538 = sbr.rel (0) target = $region41
    $region40: #{tpu_custom_call.1} parent=1 // pred_region
      %540 = dma.done [#allocation4], 256
    $region41: #{tpu_custom_call.1} parent=1 // pred_fallthru
      _
    %541 = vsyncpa [#allocation3], 1
    %542 = vsyncpa [#allocation6], 1
    %543 = vsyncpa [#allocation9], 1
    %544 = vsyncpa [#allocation4], 1

</llo_original>
